<compile_context>
chip_gen: v5e
topology: v5e:2x2
jax: 0.10.0
libtpu: 0.0.40
codegen_flags: <defaults>
</compile_context>

<pallas_src>
import math

import numpy as np
import jax
import jax.numpy as jnp
from jax.experimental import pallas as pl
from jax.experimental.pallas import tpu as pltpu


# ----------------------------------------------------------------------------
# Host-side helpers
# ----------------------------------------------------------------------------
def _nearest_indices(out_size: int, in_size: int) -> np.ndarray:
    # PyTorch 'nearest' (align_corners ignored): src = floor(dst * in / out)
    return (np.arange(out_size) * in_size) // out_size


def _grouped_selection_matrix(win: int, wout: int, sh: int, g: int) -> np.ndarray:
    """0/1 matrix of shape (g*Win, g*sh*Wout).

    Block-diagonal with g copies of tile(S, (1, sh)) where S is the (Win, Wout)
    nearest-neighbor W-selection matrix; the sh horizontal copies realize the
    H replication (each input row -> sh consecutive output rows after the free
    output reshape).
    """
    wi = _nearest_indices(wout, win)
    s = np.zeros((win, wout), dtype=np.float32)
    s[wi, np.arange(wout)] = 1.0
    st = np.tile(s, (1, sh))                       # (Win, sh*Wout): H fold
    L = sh * wout
    sg = np.zeros((g * win, g * L), dtype=np.float32)
    for b in range(g):
        sg[b * win:(b + 1) * win, b * L:(b + 1) * L] = st
    return sg


def _choose_group(rows: int, win: int, L: int, sel_itemsize: int,
                  max_g: int = 32, max_sel_bytes: int = 2 << 20) -> int:
    """Smallest g dividing `rows` with (g*L) % 128 == 0 and a small sel matrix."""
    if L % 128 == 0:
        return 1
    need = 128 // math.gcd(L, 128)
    g = need
    while g <= min(rows, max_g):
        if rows % g == 0 and (g * win) * (g * L) * sel_itemsize <= max_sel_bytes:
            return g
        g += need
    return 1


def _choose_row_tile(rows: int, pack: int, cap_rows: int, min_blocks: int):
    """Pick a row-tile TR (multiple of the dtype sublane pack) and grid extent.

    Prefers exact divisors of `rows`; otherwise falls back to a cdiv grid with
    a ragged last tile (never to the full extent), so blocks never exceed the
    VMEM budget.
    """
    cap_rows = max(pack, min(cap_rows, rows))
    if min_blocks > 1:
        cap_rows = min(cap_rows, max(pack, -(-rows // min_blocks)))
    best = None
    t = pack
    while t <= cap_rows:
        if rows % t == 0:
            best = t
        t += pack
    if best is not None:
        return best, rows // best
    tr = min(rows, max(pack, (cap_rows // pack) * pack))
    return tr, -(-rows // tr)


# ----------------------------------------------------------------------------
# Kernel: one lane-dense GEMM writes the full (W- and H-replicated) slab.
# ----------------------------------------------------------------------------
def _upsample_kernel(x_ref, sel_ref, o_ref):
    # x_ref  : (TR, g*Win)          tile of the grouped (C*Hin)//g row axis
    # sel_ref: (g*Win, g*sh*Wout)   0/1 block-diagonal selection matrix
    # o_ref  : (TR, g*sh*Wout)      full upsampled slab for these rows
    x = x_ref[...]
    if not jnp.issubdtype(x.dtype, jnp.floating):
        # TODO(synk): integer inputs with |value| >= 2^24 lose precision in the
        # float matmul path; an exact integer path needs a DMA/gather variant.
        x = x.astype(jnp.float32)
    y = jnp.dot(x, sel_ref[...], preferred_element_type=jnp.float32)
    o_ref[...] = y.astype(o_ref.dtype)


# ----------------------------------------------------------------------------
# Wrapper == Upsample.forward for NCHW, mode='nearest'
# ----------------------------------------------------------------------------
def upsample_nearest(x, size=None, scale_factor=None):
    N, C, Hin, Win = x.shape

    # --- output size (PyTorch semantics: floor(in * scale)) -----------------
    if size is not None:
        if isinstance(size, (tuple, list)):
            Hout, Wout = int(size[0]), int(size[1])
        else:
            Hout = Wout = int(size)
    else:
        if scale_factor is None:
            raise ValueError("either size or scale_factor must be given")
        if isinstance(scale_factor, (tuple, list)):
            sh_f, sw_f = float(scale_factor[0]), float(scale_factor[1])
        else:
            sh_f = sw_f = float(scale_factor)
        Hout = int(math.floor(Hin * sh_f))
        Wout = int(math.floor(Win * sw_f))

    if Hout % Hin != 0:
        # TODO(synk): non-integer H ratios need a row-gather path; this UNet
        # only uses integer scale factors (scale_factor=2 / pool sizes).
        raise NotImplementedError("nearest upsample requires Hout % Hin == 0")
    sh = Hout // Hin

    in_dtype = x.dtype
    itemsize = jnp.dtype(in_dtype).itemsize
    sel_dtype = in_dtype if jnp.issubdtype(in_dtype, jnp.floating) else jnp.float32
    sel_itemsize = jnp.dtype(sel_dtype).itemsize

    rows = C * Hin
    L = sh * Wout                                  # output cols per input row

    # Lane packing: group g consecutive rows so the output lane extent
    # (g * sh * Wout) is a multiple of 128 -> unmasked, lane-dense stores.
    g = _choose_group(rows, Win, L, sel_itemsize)
    rows_g = rows // g
    g_win = g * Win
    g_out = g * L

    sel = jnp.asarray(_grouped_selection_matrix(Win, Wout, sh, g), dtype=sel_dtype)
    x2 = x.reshape(N, rows_g, g_win)               # contiguous -> free reshape

    # Row-tile sizing: ~6 MiB per block of (input + output + f32 matmul
    # result), sublane-pack aligned per dtype; >= 2 parallel programs when
    # N == 1 so both v7x TensorCores are used.
    pack = {4: 8, 2: 16, 1: 32}.get(itemsize, 8)
    row_bytes = g_win * itemsize + g_out * itemsize + g_out * 4
    budget = 6 * 1024 * 1024
    cap_rows = max(pack, budget // max(row_bytes, 1))
    min_blocks = max(1, -(-4 // N))
    tr, grid_r = _choose_row_tile(rows_g, pack, cap_rows, min_blocks)

    # VMEM limit derived from the actual block footprint (double-buffered),
    # comfortably below v7x's 64 MiB physical VMEM.
    in_block = tr * g_win * itemsize
    out_block = tr * g_out * itemsize
    acc_block = tr * g_out * 4
    sel_bytes = g_win * g_out * sel_itemsize
    vmem_needed = 2 * (in_block + out_block) + 2 * sel_bytes + acc_block + (1 << 20)
    vmem_limit = int(min(max(vmem_needed, 16 << 20), 48 << 20))

    flops = 2 * N * rows_g * g_win * g_out
    bytes_accessed = (N * rows_g * g_win * itemsize
                      + N * rows_g * g_out * itemsize
                      + sel_bytes)

    out_flat = pl.pallas_call(
        _upsample_kernel,
        out_shape=jax.ShapeDtypeStruct((N, rows_g, g_out), in_dtype),
        grid_spec=pltpu.PrefetchScalarGridSpec(
            num_scalar_prefetch=0,
            grid=(N, grid_r),
            in_specs=[
                pl.BlockSpec((pl.Squeezed(), tr, g_win), lambda n, r: (n, r, 0)),
                pl.BlockSpec((g_win, g_out), lambda n, r: (0, 0)),  # resident
            ],
            out_specs=pl.BlockSpec((pl.Squeezed(), tr, g_out),
                                   lambda n, r: (n, r, 0)),
        ),
        compiler_params=pltpu.CompilerParams(
            dimension_semantics=("parallel", "parallel"),
            vmem_limit_bytes=vmem_limit,
        ),
        cost_estimate=pl.CostEstimate(
            flops=int(flops), transcendentals=0,
            bytes_accessed=int(bytes_accessed)),
    )(x2, sel)

    # (N, rows_g, g*sh*Wout) == flat (N, C, Hin, sh, Wout): free, contiguous
    # regrouping to NCHW output.
    return out_flat.reshape(N, C, Hout, Wout)


# ----------------------------------------------------------------------------
# Reference + test
# ----------------------------------------------------------------------------
def _reference_nearest(x, Hout, Wout):
    x = np.asarray(x)
    hi = _nearest_indices(Hout, x.shape[2])
    wi = _nearest_indices(Wout, x.shape[3])
    return x[:, :, hi][:, :, :, wi]


if __name__ == "__main__":
    key = jax.random.PRNGKey(0)
    N, C, H, W = 2, 4, 16, 16
    x = jax.random.normal(key, (N, C, H, W), dtype=jnp.float32)

    # 1) integer scale_factor, f32
    y = jax.block_until_ready(upsample_nearest(x, scale_factor=2))
    ref = _reference_nearest(np.asarray(x), H * 2, W * 2)
    assert y.shape == ref.shape, (y.shape, ref.shape)
    np.testing.assert_allclose(np.asarray(y), ref, rtol=0, atol=0)

    # 2) bf16 path (no f32 inflation of HBM traffic) — still exact.
    x_bf16 = x.astype(jnp.bfloat16)
    y_bf16 = jax.block_until_ready(upsample_nearest(x_bf16, scale_factor=(2, 2)))
    ref_bf16 = _reference_nearest(np.asarray(x_bf16), H * 2, W * 2)
    np.testing.assert_allclose(np.asarray(y_bf16).astype(np.float32),
                               ref_bf16.astype(np.float32), rtol=0, atol=0)

    # 3) explicit `size` with a non-integer W ratio (exercises the selection
    #    matrix generality and the lane-packing path).
    y3 = jax.block_until_ready(upsample_nearest(x, size=(32, 24)))
    ref3 = _reference_nearest(np.asarray(x), 32, 24)
    np.testing.assert_allclose(np.asarray(y3), ref3, rtol=0, atol=0)

    print("KERNEL_OK")
</pallas_src>

<mosaic_0001>
module attributes {stable_mosaic.version = 11 : i64} {
  func.func @_upsample_kernel(%arg0: i32, %arg1: i32, %arg2: memref<1x16x32xf32, #tpu.memory_space<vmem>>, %arg3: memref<32x128xf32, #tpu.memory_space<vmem>>, %arg4: memref<1x16x128xf32, #tpu.memory_space<vmem>>) attributes {dimension_semantics = [#tpu.dimension_semantics<parallel>, #tpu.dimension_semantics<parallel>], iteration_bounds = array<i64: 2, 2>, scalar_prefetch = 0 : i64, scratch_operands = 0 : i64, tpu.core_type = #tpu.core_type<tc>, window_params = [{transform_indices = @transform_0, window_bounds = array<i64: 1, 16, 32>}, {pipeline_mode = #tpu.pipeline_mode<synchronous>, transform_indices = @transform_1, window_bounds = array<i64: 32, 128>}, {transform_indices = @transform_2, window_bounds = array<i64: 1, 16, 128>}]} {
    %c0 = arith.constant 0 : index
    %c0_0 = arith.constant 0 : index
    %c0_1 = arith.constant 0 : index
    %0 = vector.load %arg2[%c0, %c0_0, %c0_1] : memref<1x16x32xf32, #tpu.memory_space<vmem>>, vector<1x16x32xf32>
    %1 = vector.shape_cast %0 : vector<1x16x32xf32> to vector<16x32xf32>
    %c0_2 = arith.constant 0 : index
    %c0_3 = arith.constant 0 : index
    %2 = vector.load %arg3[%c0_2, %c0_3] : memref<32x128xf32, #tpu.memory_space<vmem>>, vector<32x128xf32>
    %cst = arith.constant dense<0.000000e+00> : vector<16x128xf32>
    %3 = tpu.matmul %1, %2, %cst {dimension_numbers = #tpu.dot_dimension_numbers<[1], [0], [0], [1], [0, 0, 1, 1], [], []>} : vector<16x32xf32>, vector<32x128xf32>, vector<16x128xf32> -> vector<16x128xf32>
    %c0_4 = arith.constant 0 : index
    %c0_5 = arith.constant 0 : index
    %c0_6 = arith.constant 0 : index
    %4 = vector.load %arg4[%c0_4, %c0_5, %c0_6] : memref<1x16x128xf32, #tpu.memory_space<vmem>>, vector<1x16x128xf32>
    %5 = vector.shape_cast %4 : vector<1x16x128xf32> to vector<16x128xf32>
    %6 = vector.shape_cast %3 : vector<16x128xf32> to vector<1x16x128xf32>
    tpu.vector_store %arg4[%c0_4, %c0_5, %c0_6], %6 {strides = array<i32>} : memref<1x16x128xf32, #tpu.memory_space<vmem>>, vector<1x16x128xf32>,
    return
  }
  func.func @transform_0(%arg0: i32, %arg1: i32) -> (i32, i32, i32) {
    %c0_i32 = arith.constant 0 : i32
    %c0_i32_0 = arith.constant 0 : i32
    return %arg0, %arg1, %c0_i32 : i32, i32, i32
  }
  func.func @transform_1(%arg0: i32, %arg1: i32) -> (i32, i32) {
    %c0_i32 = arith.constant 0 : i32
    %c0_i32_0 = arith.constant 0 : i32
    %c0_i32_1 = arith.constant 0 : i32
    return %c0_i32, %c0_i32_0 : i32, i32
  }
  func.func @transform_2(%arg0: i32, %arg1: i32) -> (i32, i32, i32) {
    %c0_i32 = arith.constant 0 : i32
    %c0_i32_0 = arith.constant 0 : i32
    return %arg0, %arg1, %c0_i32 : i32, i32, i32
  }
}

</mosaic_0001>

<llo_original>
// kernel: tpu_custom_call.1
$region0: #{tpu_custom_call.1}
  #allocation0 [shape = 'u32[]', space=smem, size = 0x4, offset = 0x4, fixed_abs, tag = 'smem constant byte address 0x4 - core index']
  #allocation1 [shape = 'u32[72,128]{1,0:T(1,128)}', space=vmem, size = 0x9000, scoped, tag = 'internal scratch']
  %s0 = inlined_call_operand.hbm [shape: f32[2,32,32], index: 0, kind: input, shape index: {}]
  %s1 = inlined_call_operand.hbm [shape: f32[32,128], index: 1, kind: input, shape index: {}]
  %s2 = inlined_call_operand.hbm [shape: f32[2,32,128], index: 2, kind: output, shape index: {}]
  %s3 = sld [smem:[#allocation0]]
  $region49: #{tpu_custom_call.1} parent=0
    _
  %s5 = ssub.s32 1, %s3
  %s6 = scalar_select 0, %s5, %s3
  $region1: #{tpu_custom_call.1} parent=0
    #allocation2 [shape = 'u8[16384]{0}', space=vmem, size = 0x4000, scoped, tag = 'input window, operand 0']
    #allocation3 [shape = 's32[2]{0}', space=sflag, size = 0x8, scoped, tag = 'scoped memory for tpu_custom_call.1']
    #allocation4 [shape = 's32[2]{0}', space=sflag, size = 0x8, scoped, tag = 'scoped memory for tpu_custom_call.1']
    #allocation5 [shape = 'u8[16384]{0}', space=vmem, size = 0x4000, scoped, tag = 'input window, operand 1, single buffered']
    #allocation6 [shape = 's32[1]{0}', space=sflag, size = 0x4, scoped, tag = 'scoped memory for tpu_custom_call.1']
    #allocation7 [shape = 'u8[16384]{0}', space=vmem, size = 0x4000, scoped, tag = 'output window, operand 0']
    %7 = vsyncpa [#allocation3], 0
    %s8 = scalar_lea.sflag [#allocation3], 1
    %9 = vsyncpa %s8, 0
    %10 = vsyncpa [#allocation6], 0
    %11 = vsyncpa [#allocation4], 0
    %s12 = scalar_lea.sflag [#allocation4], 1
    %13 = vsyncpa %s12, 0
    loop: start=0, step=1, limit=6
    $region2: #{tpu_custom_call.1} parent=1 // loop_pre_header
      _
    $region3: #{tpu_custom_call.1} parent=1 // loop_header
      %s15 = sphi 0, %s19
      %p16 = scmp.ge.s32.totalorder %s15, 6
      %s22 = sphi 0, %s34
      %s23 = sphi 0, %s30
      %s24 = sphi 0, %s22
      %s25 = sphi 0, %s23
      %s26 = sphi 0, %s24
      %s27 = sphi 0, %s25
      %s39 = sphi 0, %s41
      %s42 = sphi 0, %s39
      %s43 = sphi 0, %s42
      %s59 = sphi 0, %s43
      %s63 = sphi 0, %s63
      %s65 = sphi 0, %s63
      %s66 = sphi 0, %s65
      %s80 = sphi 0, %s66
      %s88 = sphi 0, %s90
      %s91 = sphi 0, %s88
      %s92 = sphi 0, %s91
      %s108 = sphi 0, %s92
    $region4: #{tpu_custom_call.1} parent=1 // loop_header_branch
      %18 = sbr.rel (%p16) target = $region8
    $region5: #{tpu_custom_call.1} parent=1 // loop_body
      %s20 = ssub.s32 %s15, 1
      %s21 = ssub.s32 %s15, 2
      %s28 = sadd.s32 1, %s23
      %p29 = scmp.ge.s32.totalorder %s28, 2
      %s30 = scalar_select %p29, 0, %s28
      %s31 = sadd.s32 1, %s22
      %s32 = scalar_select %p29, %s31, %s22
      %p33 = scmp.ge.s32.totalorder %s32, 2
      %s34 = scalar_select %p33, 0, %s32
      %s35 = ssub.s32 %s22, %s34
      %s36 = ssub.s32 %s23, %s30
      %s37 = sor.u32 %s35, %s36
      %p38 = scmp.eq.s32.totalorder %s37, 0
      %s40 = sadd.s32 %s39, 1
      %s41 = scalar_select %p38, %s39, %s40
      %p44 = pneg %p38
      %p45 = scmp.eq.s32.totalorder %s15, 3
      %p46 = por %p44, %p45
      %p47 = scmp.ne.s32.totalorder %s39, %s42
      %p48 = scmp.eq.s32.totalorder %s15, 0
      %p49 = por %p47, %p48
      %p50 = scmp.ne.s32.totalorder %s39, %s42
      %p51 = scmp.eq.s32.totalorder %s20, 3
      %p52 = por %p50, %p51
      %p53 = scmp.ne.s32.totalorder %s42, %s43
      %p54 = scmp.eq.s32.totalorder %s20, 0
      %p55 = por %p53, %p54
      %p56 = scmp.ne.s32.totalorder %s42, %s43
      %p57 = scmp.eq.s32.totalorder %s21, 3
      %p58 = por %p56, %p57
      %p60 = scmp.ne.s32.totalorder %s43, %s59
      %p61 = scmp.eq.s32.totalorder %s21, 0
      %p62 = por %p60, %p61
      %s64 = sadd.s32 %s63, 1
      %p67 = scmp.eq.s32.totalorder %s15, 3
      %p68 = scmp.ne.s32.totalorder %s63, %s65
      %p69 = scmp.eq.s32.totalorder %s15, 0
      %p70 = por %p68, %p69
      %p71 = scmp.ne.s32.totalorder %s63, %s65
      %p72 = scmp.eq.s32.totalorder %s20, 3
      %p73 = por %p71, %p72
      %p74 = scmp.ne.s32.totalorder %s65, %s66
      %p75 = scmp.eq.s32.totalorder %s20, 0
      %p76 = por %p74, %p75
      %p77 = scmp.ne.s32.totalorder %s65, %s66
      %p78 = scmp.eq.s32.totalorder %s21, 3
      %p79 = por %p77, %p78
      %p81 = scmp.ne.s32.totalorder %s66, %s80
      %p82 = scmp.eq.s32.totalorder %s21, 0
      %p83 = por %p81, %p82
      %s84 = ssub.s32 %s22, %s34
      %s85 = ssub.s32 %s23, %s30
      %s86 = sor.u32 %s84, %s85
      %p87 = scmp.eq.s32.totalorder %s86, 0
      %s89 = sadd.s32 %s88, 1
      %s90 = scalar_select %p87, %s88, %s89
      %p93 = pneg %p87
      %p94 = scmp.eq.s32.totalorder %s15, 3
      %p95 = por %p93, %p94
      %p96 = scmp.ne.s32.totalorder %s88, %s91
      %p97 = scmp.eq.s32.totalorder %s15, 0
      %p98 = por %p96, %p97
      %p99 = scmp.ne.s32.totalorder %s88, %s91
      %p100 = scmp.eq.s32.totalorder %s20, 3
      %p101 = por %p99, %p100
      %p102 = scmp.ne.s32.totalorder %s91, %s92
      %p103 = scmp.eq.s32.totalorder %s20, 0
      %p104 = por %p102, %p103
      %p105 = scmp.ne.s32.totalorder %s91, %s92
      %p106 = scmp.eq.s32.totalorder %s21, 3
      %p107 = por %p105, %p106
      %p109 = scmp.ne.s32.totalorder %s92, %s108
      %p110 = scmp.eq.s32.totalorder %s21, 0
      %p111 = por %p109, %p110
      %p112 = scmp.le.s32.totalorder 1, %s15
      %p113 = scmp.lt.s32.totalorder %s15, 5
      %p114 = pnand %p112, %p113
      %p115 = pneg %p114
      // Predicated region
      $region9: #{tpu_custom_call.1} parent=5 // pred_check
        _
      $region10: #{tpu_custom_call.1} parent=5 // pred_check_branch
        %117 = sbr.rel (%p114) target = $region12
      $region11: #{tpu_custom_call.1} parent=5 // pred_region
        %s118 = ssub.s32 %s15, 1
        // Predicated region
        $region13: #{tpu_custom_call.1} parent=11 // pred_check
          %p119 = pneg %p76
        $region14: #{tpu_custom_call.1} parent=11 // pred_check_branch
          %121 = sbr.rel (%p119) target = $region16
        $region15: #{tpu_custom_call.1} parent=11 // pred_region
          %123 = vsyncadd [#allocation6], 0
          %s124 = sshll.u32 %s1, 4
          %s125 = int_to_ptr.hbm [resolvable:$true] %s124
          %s126 = sshll.u32 [#allocation5], 4
          %s127 = int_to_ptr.vmem [resolvable:$true] %s126
          %132 = dma.hbm_to_vmem [thread:$0]  %s125, 512, %s127, [#allocation6], 128, 128, 8
        $region16: #{tpu_custom_call.1} parent=11 // pred_fallthru
          _
      $region12: #{tpu_custom_call.1} parent=5 // pred_fallthru
        _
      %p133 = scmp.lt.s32.totalorder %s15, 4
      // Predicated region
      $region17: #{tpu_custom_call.1} parent=5 // pred_check
        %p134 = pneg %p133
      $region18: #{tpu_custom_call.1} parent=5 // pred_check_branch
        %136 = sbr.rel (%p134) target = $region20
      $region19: #{tpu_custom_call.1} parent=5 // pred_region
        // Predicated region
        $region21: #{tpu_custom_call.1} parent=19 // pred_check
          %p137 = pneg %p49
        $region22: #{tpu_custom_call.1} parent=19 // pred_check_branch
          %139 = sbr.rel (%p137) target = $region24
        $region23: #{tpu_custom_call.1} parent=19 // pred_region
          %s140 = sand.u32 %s39, 1
          %s141 = scalar_lea.sflag [#allocation3], %s140
          %s142 = sand.u32 %s39, 1
          %s143 = smul.addr %s142, 16
          %s144 = scalar_lea.vmem [#allocation2], %s143
          %s145 = smul.u32 2, %s23
          %147 = vsyncadd %s141, 0
          %s148 = smul.addr %s22, 4
          %s149 = sadd.s32 %s145, %s148
          %s150 = smul.addr %s149, 8
          %s151 = scalar_lea.hbm %s0, %s150
          %s152 = sshll.u32 %s151, 4
          %s153 = int_to_ptr.hbm [resolvable:$true] %s152
          %s154 = sshll.u32 %s144, 4
          %s155 = int_to_ptr.vmem [resolvable:$true] %s154
          %160 = dma.hbm_to_vmem [thread:$0]  %s153, 256, %s155, %s141, 128, 128, 8
        $region24: #{tpu_custom_call.1} parent=19 // pred_fallthru
          _
      $region20: #{tpu_custom_call.1} parent=5 // pred_fallthru
        _
      %p161 = scmp.le.s32.totalorder 1, %s15
      %p162 = scmp.lt.s32.totalorder %s15, 5
      %p163 = pnand %p161, %p162
      %p164 = pneg %p163
      // Predicated region
      $region25: #{tpu_custom_call.1} parent=5 // pred_check
        _
      $region26: #{tpu_custom_call.1} parent=5 // pred_check_branch
        %166 = sbr.rel (%p163) target = $region28
      $region27: #{tpu_custom_call.1} parent=5 // pred_region
        %s167 = ssub.s32 %s15, 1
        %s168 = sand.u32 %s42, 1
        %s169 = scalar_lea.sflag [#allocation3], %s168
        %s170 = sand.u32 %s42, 1
        %s171 = smul.addr %s170, 16
        %s172 = scalar_lea.vmem [#allocation2], %s171
        // Predicated region
        $region29: #{tpu_custom_call.1} parent=27 // pred_check
          %p173 = pneg %p55
        $region30: #{tpu_custom_call.1} parent=27 // pred_check_branch
          %175 = sbr.rel (%p173) target = $region32
        $region31: #{tpu_custom_call.1} parent=27 // pred_region
          %177 = dma.done %s169, 256
        $region32: #{tpu_custom_call.1} parent=27 // pred_fallthru
          _
        // Predicated region
        $region33: #{tpu_custom_call.1} parent=27 // pred_check
          %p178 = pneg %p76
        $region34: #{tpu_custom_call.1} parent=27 // pred_check_branch
          %180 = sbr.rel (%p178) target = $region36
        $region35: #{tpu_custom_call.1} parent=27 // pred_region
          %182 = dma.done [#allocation6], 512
        $region36: #{tpu_custom_call.1} parent=27 // pred_fallthru
          _
        %s183 = sand.u32 %s42, 1
        %s184 = scalar_lea.sflag [#allocation3], %s183
        %s185 = sand.u32 %s42, 1
        %s186 = smul.addr %s185, 16
        %s187 = scalar_lea.vmem [#allocation2], %s186
        %p188 = pneg %p55
        %p189 = pneg %p52
        %p190 = pneg %p76
        %p191 = pneg %p73
        %p192 = pneg %p104
        %p193 = pneg %p101
        %s194 = sand.u32 %s91, 1
        %s195 = scalar_lea.sflag [#allocation4], %s194
        %s196 = sand.u32 %s91, 1
        %s197 = smul.addr %s196, 16
        %s198 = scalar_lea.vmem [#allocation7], %s197
        %s199 = smul.u32 2, %s25
        %s200 = smul.u32 2, %s25
        %v201 = vld [vmem:[%s172] sm:$0xff]
        %v202 = vld [vmem:[%s172 + $0x8] sm:$0xff]
        %v203 = vld [vmem:[#allocation5] sm:$0xff]
        %v204 = vld [vmem:[#allocation5 + $0x8] sm:$0xff]
        %v205 = vld [vmem:[#allocation5 + $0x10] sm:$0xff]
        %v206 = vld [vmem:[#allocation5 + $0x18] sm:$0xff]
        %vm207 = vcmask 261120
        %v209 = vsel %vm207, %v201, 0
        %v212 = vsel %vm207, %v202, 0
        %214 = vmatpush.msra.mxu0 0.0
        %215 = vmatpush.msra.mxu0 0.0
        %216 = vmatpush.msra.mxu0 0.0
        %217 = vmatpush.msra.mxu0 0.0
        %218 = vmatpush.msra.mxu0 0.0
        %219 = vmatpush.msra.mxu0 0.0
        %220 = vmatpush.msra.mxu0 0.0
        %221 = vmatpush.msra.mxu0 0.0
        %222 = vmatpush.msra.mxu0 0.0
        %223 = vmatpush.msra.mxu0 0.0
        %224 = vmatpush.msra.mxu0 0.0
        %225 = vmatpush.msra.mxu0 0.0
        %226 = vmatpush.msra.mxu0 %v206
        %227 = vmatpush.msra.mxu0 %v205
        %228 = vmatpush.msra.mxu0 %v204
        %229 = vmatpush.msra.mxu0 %v203
        %230 = vmatmul.f32.gmra.mxu0 %v209
        %v231 = vpop.f32.mrf.mxu0
        %v232 = vadd.f32 0.0, %v231
        %233 = vmatmul.f32.gmra.mxu0 %v212
        %v234 = vpop.f32.mrf.mxu0
        %v235 = vadd.f32 0.0, %v234
        %236 = vdwg.mxu0
        %237 = vst [vmem:[%s198] sm:$0xff] %v232
        %238 = vst [vmem:[%s198 + $0x8] sm:$0xff] %v235
        %s239 = sand.u32 %s91, 1
        %s240 = scalar_lea.sflag [#allocation4], %s239
        %s241 = sand.u32 %s91, 1
        %s242 = smul.addr %s241, 16
        %s243 = scalar_lea.vmem [#allocation7], %s242
        // Predicated region
        $region37: #{tpu_custom_call.1} parent=27 // pred_check
          %p244 = pneg %p101
        $region38: #{tpu_custom_call.1} parent=27 // pred_check_branch
          %246 = sbr.rel (%p244) target = $region40
        $region39: #{tpu_custom_call.1} parent=27 // pred_region
          %s247 = smul.u32 2, %s25
          %249 = vsyncadd %s240, 0
          %s250 = smul.addr %s24, 4
          %s251 = sadd.s32 %s247, %s250
          %s252 = smul.addr %s251, 8
          %s253 = scalar_lea.hbm %s2, %s252
          %s254 = sshll.u32 %s243, 4
          %s255 = int_to_ptr.vmem [resolvable:$true] %s254
          %s256 = sshll.u32 %s253, 4
          %s257 = int_to_ptr.hbm [resolvable:$true] %s256
          %262 = dma.vmem_to_hbm [thread:$0]  %s255, 256, %s257, %s240, 128, 128, 8
        $region40: #{tpu_custom_call.1} parent=27 // pred_fallthru
          _
      $region28: #{tpu_custom_call.1} parent=5 // pred_fallthru
        _
      %p263 = scmp.le.s32.totalorder 2, %s15
      // Predicated region
      $region41: #{tpu_custom_call.1} parent=5 // pred_check
        %p264 = pneg %p263
      $region42: #{tpu_custom_call.1} parent=5 // pred_check_branch
        %266 = sbr.rel (%p264) target = $region44
      $region43: #{tpu_custom_call.1} parent=5 // pred_region
        %s267 = ssub.s32 %s15, 2
        // Predicated region
        $region45: #{tpu_custom_call.1} parent=43 // pred_check
          %p268 = pneg %p107
        $region46: #{tpu_custom_call.1} parent=43 // pred_check_branch
          %270 = sbr.rel (%p268) target = $region48
        $region47: #{tpu_custom_call.1} parent=43 // pred_region
          %s271 = sand.u32 %s92, 1
          %s272 = scalar_lea.sflag [#allocation4], %s271
          %s273 = sand.u32 %s92, 1
          %s274 = smul.addr %s273, 16
          %s275 = scalar_lea.vmem [#allocation7], %s274
          %277 = dma.done %s272, 256
        $region48: #{tpu_custom_call.1} parent=43 // pred_fallthru
          _
      $region44: #{tpu_custom_call.1} parent=5 // pred_fallthru
        _
    $region6: #{tpu_custom_call.1} parent=1 // loop_footer
      %s19 = sadd.s32 1, %s15
    $region7: #{tpu_custom_call.1} parent=1 // loop_footer_branch
      %14 = sbr.rel target = $region3
    $region8: #{tpu_custom_call.1} parent=1 // loop_exit
      _
    %278 = vsyncpa [#allocation3], 1
    %s279 = scalar_lea.sflag [#allocation3], 1
    %280 = vsyncpa %s279, 1
    %281 = vsyncpa [#allocation6], 1
    %282 = vsyncpa [#allocation4], 1
    %s283 = scalar_lea.sflag [#allocation4], 1
    %284 = vsyncpa %s283, 1

</llo_original>
